<compile_context>
chip_gen: v7x
topology: tpu7x:2x2x1
jax: 0.10.0
libtpu: 0.0.40
codegen_flags: <defaults>
</compile_context>

<pallas_src>
import functools
import math

import jax
import jax.numpy as jnp
from jax.experimental import pallas as pl
from jax.experimental.pallas import tpu as pltpu


# Scoped-VMEM budget: safe on v5e/v6e (128 MiB phys) and v7x (64 MiB phys).
_VMEM_LIMIT = 32 * 1024 * 1024


def _pick_tile(dim, target, align):
    """Largest multiple of `align` dividing `dim` and <= target, else full dim."""
    if dim <= target:
        return dim
    t = (target // align) * align
    while t >= align:
        if dim % t == 0:
            return t
        t -= align
    return dim


# --------------------------------------------------------------------------
# Tiled linear kernel:  o = x @ W + b   (K-accumulated, software pipelined)
# --------------------------------------------------------------------------
def _linear_kernel(x_ref, w_ref, b_ref, o_ref, acc_ref):
    @pl.when(pl.program_id(2) == 0)
    def _init():
        acc_ref[...] = jnp.zeros_like(acc_ref)

    acc_ref[...] += jnp.dot(x_ref[...], w_ref[...],
                            preferred_element_type=jnp.float32)

    @pl.when(pl.program_id(2) == pl.num_programs(2) - 1)
    def _finalize():
        o_ref[...] = (acc_ref[...] + b_ref[...].astype(jnp.float32)).astype(o_ref.dtype)


def linear_pallas(x2d, w, b):
    """x2d: (M, K), w: (K, N), b: (N,)  ->  (M, N) = x2d @ w + b."""
    M, K = x2d.shape
    N = w.shape[1]
    tm = _pick_tile(M, 256, 8)
    tn = _pick_tile(N, 512, 128)
    tk = _pick_tile(K, 512, 128)
    grid = (M // tm, N // tn, K // tk)
    return pl.pallas_call(
        _linear_kernel,
        out_shape=jax.ShapeDtypeStruct((M, N), x2d.dtype),
        grid=grid,
        in_specs=[
            pl.BlockSpec((tm, tk), lambda i, j, k: (i, k)),
            pl.BlockSpec((tk, tn), lambda i, j, k: (k, j)),
            pl.BlockSpec((1, tn), lambda i, j, k: (0, j)),
        ],
        out_specs=pl.BlockSpec((tm, tn), lambda i, j, k: (i, j)),
        scratch_shapes=[pltpu.VMEM((tm, tn), jnp.float32)],
        compiler_params=pltpu.CompilerParams(
            dimension_semantics=("parallel", "parallel", "arbitrary"),
            vmem_limit_bytes=_VMEM_LIMIT),
    )(x2d, w, b.reshape(1, N))


# --------------------------------------------------------------------------
# Flash-style attention kernel.
#   q/k/v slabs: (B, S, G, H, dk); the slot g of each operand is selected by
#   its BlockSpec index_map.  Output: lane-dense (B, Sq, H*dk).
#   Grid: (B, Sq/tq, Sk/tkv); KV axis is the (arbitrary) reduction axis with
#   per-head running (m, l, acc) scratch in VMEM.
# --------------------------------------------------------------------------
def _attn_kernel(*refs, num_heads, d_k, scale, has_mask):
    if has_mask:
        q_ref, k_ref, v_ref, msk_ref, o_ref, m_sc, l_sc, acc_sc = refs
    else:
        q_ref, k_ref, v_ref, o_ref, m_sc, l_sc, acc_sc = refs
        msk_ref = None

    ki = pl.program_id(2)

    @pl.when(ki == 0)
    def _init():
        m_sc[...] = jnp.full(m_sc.shape, -jnp.inf, dtype=m_sc.dtype)
        l_sc[...] = jnp.zeros_like(l_sc)
        acc_sc[...] = jnp.zeros_like(acc_sc)

    if has_mask:
        keep = msk_ref[0] != 0                      # (tq, tkv), 1 = keep

    # Static (unrolled) loop over heads: each head is a plain 2-D MXU matmul.
    for h in range(num_heads):
        q_h = q_ref[0, :, 0, h, :].astype(jnp.float32) * jnp.float32(scale)  # (tq, dk)
        k_h = k_ref[0, :, 0, h, :].astype(jnp.float32)                        # (tkv, dk)
        v_h = v_ref[0, :, 0, h, :].astype(jnp.float32)                        # (tkv, dk)

        # scores = q_h @ k_h^T without materializing a transpose (trans-B dot).
        s = jax.lax.dot_general(q_h, k_h, (((1,), (1,)), ((), ())),
                                preferred_element_type=jnp.float32)           # (tq, tkv)
        if has_mask:
            s = jnp.where(keep, s, jnp.float32(-1.0e9))   # masked_fill(mask==0, -1e9)

        m_prev = m_sc[h]                            # (tq, 1)
        l_prev = l_sc[h]                            # (tq, 1)
        acc_prev = acc_sc[h]                        # (tq, dk)

        m_new = jnp.maximum(m_prev, jnp.max(s, axis=-1, keepdims=True))
        alpha = jnp.exp(m_prev - m_new)
        p = jnp.exp(s - m_new)                      # (tq, tkv)

        m_sc[h] = m_new
        l_sc[h] = alpha * l_prev + jnp.sum(p, axis=-1, keepdims=True)
        acc_sc[h] = alpha * acc_prev + jnp.dot(p, v_h,
                                               preferred_element_type=jnp.float32)

    @pl.when(ki == pl.num_programs(2) - 1)
    def _finalize():
        for h in range(num_heads):
            inv_l = pl.reciprocal(l_sc[h], approx=True)   # EUP, essentially free
            o_ref[0, :, h * d_k:(h + 1) * d_k] = (acc_sc[h] * inv_l).astype(o_ref.dtype)


def _q_slot_map(g):
    return lambda b, qi, ki: (b, qi, g, 0, 0)


def _kv_slot_map(g):
    return lambda b, qi, ki: (b, ki, g, 0, 0)


def attention_pallas(q_arr, k_arr, v_arr, slots, mask, *, num_heads, d_k):
    """q/k/v slabs: (B, S, G, H, dk); slots=(gq, gk, gv) slot indices.
    mask: (B, Sq, Sk) bf16 (1=keep) or None.  Returns (B, Sq, H*dk)."""
    B, Sq = q_arr.shape[0], q_arr.shape[1]
    Sk = k_arr.shape[1]
    H, dk = num_heads, d_k
    D = H * dk
    gq, gk, gv = slots

    tq = _pick_tile(Sq, 128, 8)
    tkv = _pick_tile(Sk, 128, 128)
    grid = (B, Sq // tq, Sk // tkv)

    in_specs = [
        pl.BlockSpec((1, tq, 1, H, dk), _q_slot_map(gq)),
        pl.BlockSpec((1, tkv, 1, H, dk), _kv_slot_map(gk)),
        pl.BlockSpec((1, tkv, 1, H, dk), _kv_slot_map(gv)),
    ]
    args = [q_arr, k_arr, v_arr]
    if mask is not None:
        in_specs.append(pl.BlockSpec((1, tq, tkv), lambda b, qi, ki: (b, qi, ki)))
        args.append(mask)

    kernel = functools.partial(_attn_kernel, num_heads=H, d_k=dk,
                               scale=1.0 / math.sqrt(dk),
                               has_mask=mask is not None)

    return pl.pallas_call(
        kernel,
        out_shape=jax.ShapeDtypeStruct((B, Sq, D), q_arr.dtype),
        grid=grid,
        in_specs=in_specs,
        out_specs=pl.BlockSpec((1, tq, D), lambda b, qi, ki: (b, qi, 0)),
        scratch_shapes=[
            pltpu.VMEM((H, tq, 1), jnp.float32),    # running max   m_i
            pltpu.VMEM((H, tq, 1), jnp.float32),    # running denom l_i
            pltpu.VMEM((H, tq, dk), jnp.float32),   # running numerator
        ],
        compiler_params=pltpu.CompilerParams(
            dimension_semantics=("parallel", "parallel", "arbitrary"),
            vmem_limit_bytes=_VMEM_LIMIT),
    )(*args)


# --------------------------------------------------------------------------
# MultiHeadedAttention wrapper (parameters + free reshapes only; no transposes)
# --------------------------------------------------------------------------
class MultiHeadedAttentionPallas:
    """Eval-mode forward of the PyTorch MultiHeadedAttention module."""

    def __init__(self, h, d_model, key, dropout=0.1):
        assert d_model % h == 0
        self.h = h
        self.d_model = d_model
        self.d_k = d_model // h
        self.dropout_p = dropout  # eval mode: identity

        # 4 Linear(d_model, d_model) layers (torch default init range).
        bound = 1.0 / math.sqrt(d_model)
        keys = jax.random.split(key, 8)
        self.weights, self.biases = [], []
        for i in range(4):
            w = jax.random.uniform(keys[2 * i], (d_model, d_model),
                                   minval=-bound, maxval=bound, dtype=jnp.float32)
            b = jax.random.uniform(keys[2 * i + 1], (d_model,),
                                   minval=-bound, maxval=bound, dtype=jnp.float32)
            self.weights.append(w)
            self.biases.append(b)

        # Pre-fused projection parameters (1 matmul instead of 3 / 2).
        self.w_qkv = jnp.concatenate(self.weights[0:3], axis=1)   # (D, 3D)
        self.b_qkv = jnp.concatenate(self.biases[0:3])            # (3D,)
        self.w_kv = jnp.concatenate(self.weights[1:3], axis=1)    # (D, 2D)
        self.b_kv = jnp.concatenate(self.biases[1:3])             # (2D,)

    def __call__(self, query, key, value, mask=None):
        B, Sq, D = query.shape
        Sk = key.shape[1]
        H, dk = self.h, self.d_k

        if (query is key) and (key is value):
            # Self-attention: fused QKV projection -> (B, S, 3, H, dk) slot slab.
            qkv = linear_pallas(query.reshape(B * Sq, D), self.w_qkv,
                                self.b_qkv).reshape(B, Sq, 3, H, dk)
            q_arr = k_arr = v_arr = qkv
            slots = (0, 1, 2)
        else:
            q_arr = linear_pallas(query.reshape(B * Sq, D), self.weights[0],
                                  self.biases[0]).reshape(B, Sq, 1, H, dk)
            if key is value:
                kv = linear_pallas(key.reshape(B * Sk, D), self.w_kv,
                                   self.b_kv).reshape(B, Sk, 2, H, dk)
                k_arr = v_arr = kv
                slots = (0, 0, 1)
            else:
                k_arr = linear_pallas(key.reshape(B * Sk, D), self.weights[1],
                                      self.biases[1]).reshape(B, Sk, 1, H, dk)
                v_arr = linear_pallas(value.reshape(B * Sk, D), self.weights[2],
                                      self.biases[2]).reshape(B, Sk, 1, H, dk)
                slots = (0, 0, 0)

        if mask is None:
            mask_arr = None   # no-mask kernel path: no mask DMA / compare at all
        else:
            # torch: mask.unsqueeze(1) broadcasts over heads; ship as bf16 (1=keep).
            mask_arr = jnp.broadcast_to((mask != 0), (B, Sq, Sk)).astype(jnp.bfloat16)

        # Flash attention; output is lane-dense (B, Sq, D), heads concatenated.
        ctx = attention_pallas(q_arr, k_arr, v_arr, slots, mask_arr,
                               num_heads=H, d_k=dk)

        out = linear_pallas(ctx.reshape(B * Sq, D), self.weights[3], self.biases[3])
        return out.reshape(B, Sq, D)


# --------------------------------------------------------------------------
# Pure-JAX reference (mirrors the PyTorch module) for a correctness check.
# --------------------------------------------------------------------------
def _mha_reference(mha, query, key, value, mask=None):
    B, Sq, D = query.shape
    Sk = key.shape[1]
    H, dk = mha.h, mha.d_k

    def lin(x, i):
        return x @ mha.weights[i] + mha.biases[i]

    q = lin(query, 0).reshape(B, Sq, H, dk).transpose(0, 2, 1, 3)
    k = lin(key, 1).reshape(B, Sk, H, dk).transpose(0, 2, 1, 3)
    v = lin(value, 2).reshape(B, Sk, H, dk).transpose(0, 2, 1, 3)
    s = jnp.einsum('bhqd,bhkd->bhqk', q, k) / math.sqrt(dk)
    if mask is not None:
        s = jnp.where(mask[:, None, :, :] == 0, -1.0e9, s)
    p = jax.nn.softmax(s, axis=-1)
    ctx = jnp.einsum('bhqk,bhkd->bhqd', p, v)
    ctx = ctx.transpose(0, 2, 1, 3).reshape(B, Sq, D)
    return lin(ctx, 3)


if __name__ == "__main__":
    B, S, d_model, h = 2, 16, 128, 4

    root = jax.random.PRNGKey(0)
    k_params, k_x, k_y = jax.random.split(root, 3)

    mha = MultiHeadedAttentionPallas(h, d_model, k_params)

    x = jax.random.normal(k_x, (B, S, d_model), dtype=jnp.float32)
    y = jax.random.normal(k_y, (B, S, d_model), dtype=jnp.float32)

    causal = jnp.tril(jnp.ones((S, S), dtype=jnp.int32))
    mask = jnp.broadcast_to(causal[None], (B, S, S))

    # 1) self-attention, no mask (fused QKV projection, mask-free kernel path)
    out1 = mha(x, x, x, mask=None)
    # 2) self-attention with a causal mask (masked kernel path)
    out2 = mha(x, x, x, mask=mask)
    # 3) cross-attention (separate Q projection, fused KV projection)
    out3 = mha(x, y, y, mask=None)

    jax.block_until_ready((out1, out2, out3))

    ref1 = _mha_reference(mha, x, x, x, None)
    ref2 = _mha_reference(mha, x, x, x, mask)
    ref3 = _mha_reference(mha, x, y, y, None)

    assert out1.shape == (B, S, d_model)
    assert out2.shape == (B, S, d_model)
    assert out3.shape == (B, S, d_model)
    assert jnp.allclose(out1, ref1, atol=2e-2, rtol=2e-2)
    assert jnp.allclose(out2, ref2, atol=2e-2, rtol=2e-2)
    assert jnp.allclose(out3, ref3, atol=2e-2, rtol=2e-2)

    print("KERNEL_OK")
</pallas_src>

<mosaic_0001>
module attributes {stable_mosaic.version = 11 : i64} {
  func.func @_linear_kernel(%arg0: i32, %arg1: i32, %arg2: i32, %arg3: memref<32x128xf32, #tpu.memory_space<vmem>>, %arg4: memref<128x384xf32, #tpu.memory_space<vmem>>, %arg5: memref<1x384xf32, #tpu.memory_space<vmem>>, %arg6: memref<32x384xf32, #tpu.memory_space<vmem>>, %arg7: memref<32x384xf32, #tpu.memory_space<vmem>>) attributes {dimension_semantics = [#tpu.dimension_semantics<parallel>, #tpu.dimension_semantics<parallel>, #tpu.dimension_semantics<arbitrary>], iteration_bounds = array<i64: 1, 1, 1>, scalar_prefetch = 0 : i64, scratch_operands = 1 : i64, tpu.core_type = #tpu.core_type<tc>, window_params = [{transform_indices = @transform_0, window_bounds = array<i64: 32, 128>}, {transform_indices = @transform_1, window_bounds = array<i64: 128, 384>}, {transform_indices = @transform_2, window_bounds = array<i64: 1, 384>}, {transform_indices = @transform_3, window_bounds = array<i64: 32, 384>}]} {
    %c0_i32 = arith.constant 0 : i32
    %0 = arith.cmpi eq, %arg2, %c0_i32 : i32
    %1 = arith.extui %0 : i1 to i32
    %c0_i32_0 = arith.constant 0 : i32
    %2 = arith.cmpi ne, %1, %c0_i32_0 : i32
    scf.if %2 {
      %cst_10 = arith.constant 0.000000e+00 : f32
      %12 = vector.broadcast %cst_10 : f32 to vector<32x384xf32>
      %c0_11 = arith.constant 0 : index
      %c0_12 = arith.constant 0 : index
      %13 = vector.load %arg7[%c0_11, %c0_12] : memref<32x384xf32, #tpu.memory_space<vmem>>, vector<32x384xf32>
      tpu.vector_store %arg7[%c0_11, %c0_12], %12 {strides = array<i32>} : memref<32x384xf32, #tpu.memory_space<vmem>>, vector<32x384xf32>,
    } else {
    }
    %c0 = arith.constant 0 : index
    %c0_1 = arith.constant 0 : index
    %3 = vector.load %arg7[%c0, %c0_1] : memref<32x384xf32, #tpu.memory_space<vmem>>, vector<32x384xf32>
    %c0_2 = arith.constant 0 : index
    %c0_3 = arith.constant 0 : index
    %4 = vector.load %arg3[%c0_2, %c0_3] : memref<32x128xf32, #tpu.memory_space<vmem>>, vector<32x128xf32>
    %c0_4 = arith.constant 0 : index
    %c0_5 = arith.constant 0 : index
    %5 = vector.load %arg4[%c0_4, %c0_5] : memref<128x384xf32, #tpu.memory_space<vmem>>, vector<128x384xf32>
    %cst = arith.constant dense<0.000000e+00> : vector<32x384xf32>
    %6 = tpu.matmul %4, %5, %cst {dimension_numbers = #tpu.dot_dimension_numbers<[1], [0], [0], [1], [0, 0, 1, 1], [], []>} : vector<32x128xf32>, vector<128x384xf32>, vector<32x384xf32> -> vector<32x384xf32>
    %7 = arith.addf %3, %6 : vector<32x384xf32>
    %c0_6 = arith.constant 0 : index
    %c0_7 = arith.constant 0 : index
    %8 = vector.load %arg7[%c0_6, %c0_7] : memref<32x384xf32, #tpu.memory_space<vmem>>, vector<32x384xf32>
    tpu.vector_store %arg7[%c0_6, %c0_7], %7 {strides = array<i32>} : memref<32x384xf32, #tpu.memory_space<vmem>>, vector<32x384xf32>,
    %c0_i32_8 = arith.constant 0 : i32
    %9 = arith.cmpi eq, %arg2, %c0_i32_8 : i32
    %10 = arith.extui %9 : i1 to i32
    %c0_i32_9 = arith.constant 0 : i32
    %11 = arith.cmpi ne, %10, %c0_i32_9 : i32
    scf.if %11 {
      %c0_10 = arith.constant 0 : index
      %c0_11 = arith.constant 0 : index
      %12 = vector.load %arg7[%c0_10, %c0_11] : memref<32x384xf32, #tpu.memory_space<vmem>>, vector<32x384xf32>
      %c0_12 = arith.constant 0 : index
      %c0_13 = arith.constant 0 : index
      %13 = vector.load %arg5[%c0_12, %c0_13] : memref<1x384xf32, #tpu.memory_space<vmem>>, vector<1x384xf32>
      %14 = vector.broadcast %13 : vector<1x384xf32> to vector<32x384xf32>
      %15 = arith.addf %12, %14 : vector<32x384xf32>
      %c0_14 = arith.constant 0 : index
      %c0_15 = arith.constant 0 : index
      %16 = vector.load %arg6[%c0_14, %c0_15] : memref<32x384xf32, #tpu.memory_space<vmem>>, vector<32x384xf32>
      tpu.vector_store %arg6[%c0_14, %c0_15], %15 {strides = array<i32>} : memref<32x384xf32, #tpu.memory_space<vmem>>, vector<32x384xf32>,
    } else {
    }
    return
  }
  func.func @transform_0(%arg0: i32, %arg1: i32, %arg2: i32) -> (i32, i32) {
    %c0_i32 = arith.constant 0 : i32
    return %arg0, %arg2 : i32, i32
  }
  func.func @transform_1(%arg0: i32, %arg1: i32, %arg2: i32) -> (i32, i32) {
    %c0_i32 = arith.constant 0 : i32
    return %arg2, %arg1 : i32, i32
  }
  func.func @transform_2(%arg0: i32, %arg1: i32, %arg2: i32) -> (i32, i32) {
    %c0_i32 = arith.constant 0 : i32
    %c0_i32_0 = arith.constant 0 : i32
    return %c0_i32, %arg1 : i32, i32
  }
  func.func @transform_3(%arg0: i32, %arg1: i32, %arg2: i32) -> (i32, i32) {
    %c0_i32 = arith.constant 0 : i32
    return %arg0, %arg1 : i32, i32
  }
}

</mosaic_0001>

<llo_original>
// kernel: tpu_custom_call.1
$region0: #{tpu_custom_call.1}
  #allocation0 [shape = 'u32[]', space=smem, size = 0x4, offset = 0x4, fixed_abs, tag = 'smem constant byte address 0x4 - core index']
  #allocation1 [shape = 'u32[144,128]{1,0:T(1,128)}', space=vmem, size = 0x12000, scoped, tag = 'internal scratch']
  #allocation2 [shape = 'f32[32,384]{1,0:T(8,128)}', space=vmem, size = 0xc000, scoped, tag = 'scratch operand']
  %s0 = inlined_call_operand.hbm [shape: f32[32,128], index: 0, kind: input, shape index: {}]
  %s1 = inlined_call_operand.hbm [shape: f32[128,384], index: 1, kind: input, shape index: {}]
  %s2 = inlined_call_operand.vmem [shape: f32[1,384], index: 2, kind: input, shape index: {}]
  %s3 = inlined_call_operand.hbm [shape: f32[32,384], index: 3, kind: output, shape index: {}]
  %s4 = sld [smem:[#allocation0]]
  $region38: #{tpu_custom_call.1} parent=0
    _
  %s6 = ssub.s32 1, %s4
  %s7 = scalar_select 0, %s6, %s4
  $region1: #{tpu_custom_call.1} parent=0
    #allocation3 [shape = 'u8[16384]{0}', space=vmem, size = 0x4000, scoped, tag = 'input window, operand 0, single buffered']
    #allocation4 [shape = 's32[1]{0}', space=sflag, size = 0x4, scoped, tag = 'scoped memory for tpu_custom_call.1']
    #allocation5 [shape = 's32[1]{0}', space=sflag, size = 0x4, scoped, tag = 'scoped memory for tpu_custom_call.1']
    #allocation6 [shape = 'u8[196608]{0}', space=vmem, size = 0x30000, scoped, tag = 'input window, operand 1, single buffered']
    #allocation7 [shape = 's32[1]{0}', space=sflag, size = 0x4, scoped, tag = 'scoped memory for tpu_custom_call.1']
    #allocation8 [shape = 'u8[49152]{0}', space=vmem, size = 0xc000, scoped, tag = 'output window, operand 0, single buffered']
    %8 = vsyncpa [#allocation4], 0
    %9 = vsyncpa [#allocation7], 0
    %10 = vsyncpa [#allocation5], 0
    // Predicated region
    $region2: #{tpu_custom_call.1} parent=1 // pred_check
      _
    $region3: #{tpu_custom_call.1} parent=1 // pred_check_branch
      %12 = sbr.rel (0) target = $region5
    $region4: #{tpu_custom_call.1} parent=1 // pred_region
      %s14 = ssub.s32 512, 512
      %15 = vsyncadd [#allocation4], %s14
      %s16 = sshll.u32 [#allocation3], 4
      %s17 = int_to_ptr.vmem [resolvable:$true] %s16
      %22 = dma.hbm_to_vmem [thread:$0]  %s0, 512, %s17, [#allocation4], 128, 128, 8
    $region5: #{tpu_custom_call.1} parent=1 // pred_fallthru
      _
    // Predicated region
    $region6: #{tpu_custom_call.1} parent=1 // pred_check
      _
    $region7: #{tpu_custom_call.1} parent=1 // pred_check_branch
      %24 = sbr.rel (0) target = $region9
    $region8: #{tpu_custom_call.1} parent=1 // pred_region
      %s26 = ssub.s32 6144, 6144
      %27 = vsyncadd [#allocation7], %s26
      %s28 = sshll.u32 [#allocation6], 4
      %s29 = int_to_ptr.vmem [resolvable:$true] %s28
      %34 = dma.hbm_to_vmem [thread:$0]  %s1, 6144, %s29, [#allocation7], 384, 384, 24
    $region9: #{tpu_custom_call.1} parent=1 // pred_fallthru
      _
    // Predicated region
    $region10: #{tpu_custom_call.1} parent=1 // pred_check
      _
    $region11: #{tpu_custom_call.1} parent=1 // pred_check_branch
      %36 = sbr.rel (0) target = $region13
    $region12: #{tpu_custom_call.1} parent=1 // pred_region
      _
    $region13: #{tpu_custom_call.1} parent=1 // pred_fallthru
      _
    // Predicated region
    $region14: #{tpu_custom_call.1} parent=1 // pred_check
      _
    $region15: #{tpu_custom_call.1} parent=1 // pred_check_branch
      %38 = sbr.rel (0) target = $region17
    $region16: #{tpu_custom_call.1} parent=1 // pred_region
      %39 = dma.done [#allocation4], 512
    $region17: #{tpu_custom_call.1} parent=1 // pred_fallthru
      _
    // Predicated region
    $region18: #{tpu_custom_call.1} parent=1 // pred_check
      _
    $region19: #{tpu_custom_call.1} parent=1 // pred_check_branch
      %41 = sbr.rel (0) target = $region21
    $region20: #{tpu_custom_call.1} parent=1 // pred_region
      %42 = dma.done [#allocation7], 6144
    $region21: #{tpu_custom_call.1} parent=1 // pred_fallthru
      _
    %p43 = scmp.eq.s32.totalorder 0, 0
    // Predicated region
    $region22: #{tpu_custom_call.1} parent=1 // pred_check
      %p44 = pneg %p43
    $region23: #{tpu_custom_call.1} parent=1 // pred_check_branch
      %46 = sbr.rel (%p44) target = $region25
    $region24: #{tpu_custom_call.1} parent=1 // pred_region
      %47 = vst [vmem:[#allocation2] sm:$0xff] 0.0
      %48 = vst [vmem:[#allocation2 + $0x8] sm:$0xff] 0.0
      %49 = vst [vmem:[#allocation2 + $0x10] sm:$0xff] 0.0
      %50 = vst [vmem:[#allocation2 + $0x18] sm:$0xff] 0.0
      %51 = vst [vmem:[#allocation2 + $0x20] sm:$0xff] 0.0
      %52 = vst [vmem:[#allocation2 + $0x28] sm:$0xff] 0.0
      %53 = vst [vmem:[#allocation2 + $0x30] sm:$0xff] 0.0
      %54 = vst [vmem:[#allocation2 + $0x38] sm:$0xff] 0.0
      %55 = vst [vmem:[#allocation2 + $0x40] sm:$0xff] 0.0
      %56 = vst [vmem:[#allocation2 + $0x48] sm:$0xff] 0.0
      %57 = vst [vmem:[#allocation2 + $0x50] sm:$0xff] 0.0
      %58 = vst [vmem:[#allocation2 + $0x58] sm:$0xff] 0.0
    $region25: #{tpu_custom_call.1} parent=1 // pred_fallthru
      _
    %v59 = vld [vmem:[#allocation2] sm:$0xff]
    %v60 = vld [vmem:[#allocation2 + $0x8] sm:$0xff]
    %v61 = vld [vmem:[#allocation2 + $0x10] sm:$0xff]
    %v62 = vld [vmem:[#allocation2 + $0x18] sm:$0xff]
    %v63 = vld [vmem:[#allocation2 + $0x20] sm:$0xff]
    %v64 = vld [vmem:[#allocation2 + $0x28] sm:$0xff]
    %v65 = vld [vmem:[#allocation2 + $0x30] sm:$0xff]
    %v66 = vld [vmem:[#allocation2 + $0x38] sm:$0xff]
    %v67 = vld [vmem:[#allocation2 + $0x40] sm:$0xff]
    %v68 = vld [vmem:[#allocation2 + $0x48] sm:$0xff]
    %v69 = vld [vmem:[#allocation2 + $0x50] sm:$0xff]
    %v70 = vld [vmem:[#allocation2 + $0x58] sm:$0xff]
    %v71 = vld [vmem:[#allocation3] sm:$0xff]
    %v72 = vld [vmem:[#allocation3 + $0x8] sm:$0xff]
    %v73 = vld [vmem:[#allocation3 + $0x10] sm:$0xff]
    %v74 = vld [vmem:[#allocation3 + $0x18] sm:$0xff]
    %v75 = vld [vmem:[#allocation6] sm:$0xff]
    %v76 = vld [vmem:[#allocation6 + $0x8] sm:$0xff]
    %v77 = vld [vmem:[#allocation6 + $0x10] sm:$0xff]
    %v78 = vld [vmem:[#allocation6 + $0x18] sm:$0xff]
    %v79 = vld [vmem:[#allocation6 + $0x20] sm:$0xff]
    %v80 = vld [vmem:[#allocation6 + $0x28] sm:$0xff]
    %v81 = vld [vmem:[#allocation6 + $0x30] sm:$0xff]
    %v82 = vld [vmem:[#allocation6 + $0x38] sm:$0xff]
    %v83 = vld [vmem:[#allocation6 + $0x40] sm:$0xff]
    %v84 = vld [vmem:[#allocation6 + $0x48] sm:$0xff]
    %v85 = vld [vmem:[#allocation6 + $0x50] sm:$0xff]
    %v86 = vld [vmem:[#allocation6 + $0x58] sm:$0xff]
    %v87 = vld [vmem:[#allocation6 + $0x60] sm:$0xff]
    %v88 = vld [vmem:[#allocation6 + $0x68] sm:$0xff]
    %v89 = vld [vmem:[#allocation6 + $0x70] sm:$0xff]
    %v90 = vld [vmem:[#allocation6 + $0x78] sm:$0xff]
    %v91 = vld [vmem:[#allocation6 + $0x80] sm:$0xff]
    %v92 = vld [vmem:[#allocation6 + $0x88] sm:$0xff]
    %v93 = vld [vmem:[#allocation6 + $0x90] sm:$0xff]
    %v94 = vld [vmem:[#allocation6 + $0x98] sm:$0xff]
    %v95 = vld [vmem:[#allocation6 + $0xa0] sm:$0xff]
    %v96 = vld [vmem:[#allocation6 + $0xa8] sm:$0xff]
    %v97 = vld [vmem:[#allocation6 + $0xb0] sm:$0xff]
    %v98 = vld [vmem:[#allocation6 + $0xb8] sm:$0xff]
    %v99 = vld [vmem:[#allocation6 + $0xc0] sm:$0xff]
    %v100 = vld [vmem:[#allocation6 + $0xc8] sm:$0xff]
    %v101 = vld [vmem:[#allocation6 + $0xd0] sm:$0xff]
    %v102 = vld [vmem:[#allocation6 + $0xd8] sm:$0xff]
    %v103 = vld [vmem:[#allocation6 + $0xe0] sm:$0xff]
    %v104 = vld [vmem:[#allocation6 + $0xe8] sm:$0xff]
    %v105 = vld [vmem:[#allocation6 + $0xf0] sm:$0xff]
    %v106 = vld [vmem:[#allocation6 + $0xf8] sm:$0xff]
    %v107 = vld [vmem:[#allocation6 + $0x100] sm:$0xff]
    %v108 = vld [vmem:[#allocation6 + $0x108] sm:$0xff]
    %v109 = vld [vmem:[#allocation6 + $0x110] sm:$0xff]
    %v110 = vld [vmem:[#allocation6 + $0x118] sm:$0xff]
    %v111 = vld [vmem:[#allocation6 + $0x120] sm:$0xff]
    %v112 = vld [vmem:[#allocation6 + $0x128] sm:$0xff]
    %v113 = vld [vmem:[#allocation6 + $0x130] sm:$0xff]
    %v114 = vld [vmem:[#allocation6 + $0x138] sm:$0xff]
    %v115 = vld [vmem:[#allocation6 + $0x140] sm:$0xff]
    %v116 = vld [vmem:[#allocation6 + $0x148] sm:$0xff]
    %v117 = vld [vmem:[#allocation6 + $0x150] sm:$0xff]
    %v118 = vld [vmem:[#allocation6 + $0x158] sm:$0xff]
    %v119 = vld [vmem:[#allocation6 + $0x160] sm:$0xff]
    %v120 = vld [vmem:[#allocation6 + $0x168] sm:$0xff]
    %v121 = vld [vmem:[#allocation6 + $0x170] sm:$0xff]
    %v122 = vld [vmem:[#allocation6 + $0x178] sm:$0xff]
    %123 = vmatprep.subr.mxu0 %v76
    %124 = vmatpush1.msra.mxu0 %v75
    %125 = vmatprep.subr.mxu0 %v79
    %126 = vmatpush1.msra.mxu0 %v78
    %127 = vmatprep.subr.mxu0 %v82
    %128 = vmatpush1.msra.mxu0 %v81
    %129 = vmatprep.subr.mxu0 %v85
    %130 = vmatpush1.msra.mxu0 %v84
    %131 = vmatprep.subr.mxu0 %v88
    %132 = vmatpush1.msra.mxu0 %v87
    %133 = vmatprep.subr.mxu0 %v91
    %134 = vmatpush1.msra.mxu0 %v90
    %135 = vmatprep.subr.mxu0 %v94
    %136 = vmatpush1.msra.mxu0 %v93
    %137 = vmatprep.subr.mxu0 %v97
    %138 = vmatpush1.msra.mxu0 %v96
    %139 = vmatprep.subr.mxu0 %v100
    %140 = vmatpush1.msra.mxu0 %v99
    %141 = vmatprep.subr.mxu0 %v103
    %142 = vmatpush1.msra.mxu0 %v102
    %143 = vmatprep.subr.mxu0 %v106
    %144 = vmatpush1.msra.mxu0 %v105
    %145 = vmatprep.subr.mxu0 %v109
    %146 = vmatpush1.msra.mxu0 %v108
    %147 = vmatprep.subr.mxu0 %v112
    %148 = vmatpush1.msra.mxu0 %v111
    %149 = vmatprep.subr.mxu0 %v115
    %150 = vmatpush1.msra.mxu0 %v114
    %151 = vmatprep.subr.mxu0 %v118
    %152 = vmatpush1.msra.mxu0 %v117
    %153 = vmatprep.subr.mxu0 %v121
    %154 = vmatpush1.msra.mxu0 %v120
    %155 = vmatprep.subr.mxu0 0.0
    %156 = vmatpush1.msra.mxu0 0.0
    %157 = vmatprep.subr.mxu0 0.0
    %158 = vmatpush1.msra.mxu0 0.0
    %159 = vmatprep.subr.mxu0 0.0
    %160 = vmatpush1.msra.mxu0 0.0
    %161 = vmatprep.subr.mxu0 0.0
    %162 = vmatpush1.msra.mxu0 0.0
    %163 = vmatprep.subr.mxu0 0.0
    %164 = vmatpush1.msra.mxu0 0.0
    %165 = vmatprep.subr.mxu0 0.0
    %166 = vmatpush1.msra.mxu0 0.0
    %167 = vmatprep.subr.mxu0 0.0
    %168 = vmatpush1.msra.mxu0 0.0
    %169 = vmatprep.subr.mxu0 0.0
    %170 = vmatpush1.msra.mxu0 0.0
    %171 = vmatprep.subr.mxu0 0.0
    %172 = vmatpush1.msra.mxu0 0.0
    %173 = vmatprep.subr.mxu0 0.0
    %174 = vmatpush1.msra.mxu0 0.0
    %175 = vmatprep.subr.mxu0 0.0
    %176 = vmatpush1.msra.mxu0 0.0
    %177 = vmatprep.subr.mxu0 0.0
    %178 = vmatpush1.msra.mxu0 0.0
    %179 = vmatprep.subr.mxu0 0.0
    %180 = vmatpush1.msra.mxu0 0.0
    %181 = vmatprep.subr.mxu0 0.0
    %182 = vmatpush1.msra.mxu0 0.0
    %183 = vmatprep.subr.mxu0 0.0
    %184 = vmatpush1.msra.mxu0 0.0
    %185 = vmatprep.subr.mxu0 0.0
    %186 = vmatpush1.msra.mxu0 0.0
    %187 = vmatprep.mubr.f32.mxu0 0.0
    %188 = vmatmul.mubr.f32.gmra.mrb[0].mxu0 %v71
    %v189 = vpop.f32.mrb[0].mxu0
    %v190 = vadd.f32 0.0, %v189
    %v191 = vpop.f32.mrb[0].mxu0
    %v192 = vadd.f32 0.0, %v191
    %193 = vmatprep.mubr.f32.mxu0 0.0
    %194 = vmatmul.mubr.f32.gmra.mrb[0].mxu0 %v72
    %v195 = vpop.f32.mrb[0].mxu0
    %v196 = vadd.f32 0.0, %v195
    %v197 = vpop.f32.mrb[0].mxu0
    %v198 = vadd.f32 0.0, %v197
    %199 = vmatprep.mubr.f32.mxu0 0.0
    %200 = vmatmul.mubr.f32.gmra.mrb[0].mxu0 %v73
    %v201 = vpop.f32.mrb[0].mxu0
    %v202 = vadd.f32 0.0, %v201
    %v203 = vpop.f32.mrb[0].mxu0
    %v204 = vadd.f32 0.0, %v203
    %205 = vmatprep.mubr.f32.mxu0 0.0
    %206 = vmatmul.mubr.f32.gmra.mrb[0].mxu0 %v74
    %v207 = vpop.f32.mrb[0].mxu0
    %v208 = vadd.f32 0.0, %v207
    %v209 = vpop.f32.mrb[0].mxu0
    %v210 = vadd.f32 0.0, %v209
    %211 = vdwg.mxu0
    %212 = vmatprep.subr.mxu0 0.0
    %213 = vmatpush1.msra.mxu0 %v77
    %214 = vmatprep.subr.mxu0 0.0
    %215 = vmatpush1.msra.mxu0 %v80
    %216 = vmatprep.subr.mxu0 0.0
    %217 = vmatpush1.msra.mxu0 %v83
    %218 = vmatprep.subr.mxu0 0.0
    %219 = vmatpush1.msra.mxu0 %v86
    %220 = vmatprep.subr.mxu0 0.0
    %221 = vmatpush1.msra.mxu0 %v89
    %222 = vmatprep.subr.mxu0 0.0
    %223 = vmatpush1.msra.mxu0 %v92
    %224 = vmatprep.subr.mxu0 0.0
    %225 = vmatpush1.msra.mxu0 %v95
    %226 = vmatprep.subr.mxu0 0.0
    %227 = vmatpush1.msra.mxu0 %v98
    %228 = vmatprep.subr.mxu0 0.0
    %229 = vmatpush1.msra.mxu0 %v101
    %230 = vmatprep.subr.mxu0 0.0
    %231 = vmatpush1.msra.mxu0 %v104
    %232 = vmatprep.subr.mxu0 0.0
    %233 = vmatpush1.msra.mxu0 %v107
    %234 = vmatprep.subr.mxu0 0.0
    %235 = vmatpush1.msra.mxu0 %v110
    %236 = vmatprep.subr.mxu0 0.0
    %237 = vmatpush1.msra.mxu0 %v113
    %238 = vmatprep.subr.mxu0 0.0
    %239 = vmatpush1.msra.mxu0 %v116
    %240 = vmatprep.subr.mxu0 0.0
    %241 = vmatpush1.msra.mxu0 %v119
    %242 = vmatprep.subr.mxu0 0.0
    %243 = vmatpush1.msra.mxu0 %v122
    %244 = vmatprep.subr.mxu0 0.0
    %245 = vmatpush1.msra.mxu0 0.0
    %246 = vmatprep.subr.mxu0 0.0
    %247 = vmatpush1.msra.mxu0 0.0
    %248 = vmatprep.subr.mxu0 0.0
    %249 = vmatpush1.msra.mxu0 0.0
    %250 = vmatprep.subr.mxu0 0.0
    %251 = vmatpush1.msra.mxu0 0.0
    %252 = vmatprep.subr.mxu0 0.0
    %253 = vmatpush1.msra.mxu0 0.0
    %254 = vmatprep.subr.mxu0 0.0
    %255 = vmatpush1.msra.mxu0 0.0
    %256 = vmatprep.subr.mxu0 0.0
    %257 = vmatpush1.msra.mxu0 0.0
    %258 = vmatprep.subr.mxu0 0.0
    %259 = vmatpush1.msra.mxu0 0.0
    %260 = vmatprep.subr.mxu0 0.0
    %261 = vmatpush1.msra.mxu0 0.0
    %262 = vmatprep.subr.mxu0 0.0
    %263 = vmatpush1.msra.mxu0 0.0
    %264 = vmatprep.subr.mxu0 0.0
    %265 = vmatpush1.msra.mxu0 0.0
    %266 = vmatprep.subr.mxu0 0.0
    %267 = vmatpush1.msra.mxu0 0.0
    %268 = vmatprep.subr.mxu0 0.0
    %269 = vmatpush1.msra.mxu0 0.0
    %270 = vmatprep.subr.mxu0 0.0
    %271 = vmatpush1.msra.mxu0 0.0
    %272 = vmatprep.subr.mxu0 0.0
    %273 = vmatpush1.msra.mxu0 0.0
    %274 = vmatprep.subr.mxu0 0.0
    %275 = vmatpush1.msra.mxu0 0.0
    %276 = vmatprep.mubr.f32.mxu0 0.0
    %277 = vmatmul.mubr.f32.gmra.mrb[0].mxu0 %v71
    %v278 = vpop.f32.mrb[0].mxu0
    %v279 = vadd.f32 0.0, %v278
    %v280 = vpop.f32.mrb[0].mxu0
    %281 = vmatprep.mubr.f32.mxu0 0.0
    %282 = vmatmul.mubr.f32.gmra.mrb[0].mxu0 %v72
    %v283 = vpop.f32.mrb[0].mxu0
    %v284 = vadd.f32 0.0, %v283
    %v285 = vpop.f32.mrb[0].mxu0
    %286 = vmatprep.mubr.f32.mxu0 0.0
    %287 = vmatmul.mubr.f32.gmra.mrb[0].mxu0 %v73
    %v288 = vpop.f32.mrb[0].mxu0
    %v289 = vadd.f32 0.0, %v288
    %v290 = vpop.f32.mrb[0].mxu0
    %291 = vmatprep.mubr.f32.mxu0 0.0
    %292 = vmatmul.mubr.f32.gmra.mrb[0].mxu0 %v74
    %v293 = vpop.f32.mrb[0].mxu0
    %v294 = vadd.f32 0.0, %v293
    %v295 = vpop.f32.mrb[0].mxu0
    %296 = vdwg.mxu0
    %v297 = vadd.f32 %v59, %v190
    %v298 = vadd.f32 %v60, %v192
    %v299 = vadd.f32 %v61, %v279
    %v300 = vadd.f32 %v62, %v196
    %v301 = vadd.f32 %v63, %v198
    %v302 = vadd.f32 %v64, %v284
    %v303 = vadd.f32 %v65, %v202
    %v304 = vadd.f32 %v66, %v204
    %v305 = vadd.f32 %v67, %v289
    %v306 = vadd.f32 %v68, %v208
    %v307 = vadd.f32 %v69, %v210
    %v308 = vadd.f32 %v70, %v294
    %309 = vst [vmem:[#allocation2] sm:$0xff] %v297
    %310 = vst [vmem:[#allocation2 + $0x8] sm:$0xff] %v298
    %311 = vst [vmem:[#allocation2 + $0x10] sm:$0xff] %v299
    %312 = vst [vmem:[#allocation2 + $0x18] sm:$0xff] %v300
    %313 = vst [vmem:[#allocation2 + $0x20] sm:$0xff] %v301
    %314 = vst [vmem:[#allocation2 + $0x28] sm:$0xff] %v302
    %315 = vst [vmem:[#allocation2 + $0x30] sm:$0xff] %v303
    %316 = vst [vmem:[#allocation2 + $0x38] sm:$0xff] %v304
    %317 = vst [vmem:[#allocation2 + $0x40] sm:$0xff] %v305
    %318 = vst [vmem:[#allocation2 + $0x48] sm:$0xff] %v306
    %319 = vst [vmem:[#allocation2 + $0x50] sm:$0xff] %v307
    %320 = vst [vmem:[#allocation2 + $0x58] sm:$0xff] %v308
    // Predicated region
    $region26: #{tpu_custom_call.1} parent=1 // pred_check
      %p321 = pneg %p43
    $region27: #{tpu_custom_call.1} parent=1 // pred_check_branch
      %323 = sbr.rel (%p321) target = $region29
    $region28: #{tpu_custom_call.1} parent=1 // pred_region
      %v324 = vld [vmem:[#allocation2] sm:$0xff]
      %v325 = vld [vmem:[#allocation2 + $0x8] sm:$0xff]
      %v326 = vld [vmem:[#allocation2 + $0x10] sm:$0xff]
      %v327 = vld [vmem:[#allocation2 + $0x18] sm:$0xff]
      %v328 = vld [vmem:[#allocation2 + $0x20] sm:$0xff]
      %v329 = vld [vmem:[#allocation2 + $0x28] sm:$0xff]
      %v330 = vld [vmem:[#allocation2 + $0x30] sm:$0xff]
      %v331 = vld [vmem:[#allocation2 + $0x38] sm:$0xff]
      %v332 = vld [vmem:[#allocation2 + $0x40] sm:$0xff]
      %v333 = vld [vmem:[#allocation2 + $0x48] sm:$0xff]
      %v334 = vld [vmem:[#allocation2 + $0x50] sm:$0xff]
      %v335 = vld [vmem:[#allocation2 + $0x58] sm:$0xff]
      %v336 = vld [vmem:[%s2] sm:$0x7]
      %v338 = vlaneseq
      %v339 = vshrl.u32 %v338, 7
      %v340 = vsub.s32 0, %v339
      %v341 = vrot.slane %v336, %v340
      %v342 = vlaneseq
      %v343 = vshrl.u32 %v342, 7
      %v344 = vsub.s32 1, %v343
      %v345 = vrot.slane %v336, %v344
      %v346 = vlaneseq
      %v347 = vshrl.u32 %v346, 7
      %v348 = vsub.s32 2, %v347
      %v349 = vrot.slane %v336, %v348
      %v353 = vadd.f32 %v324, %v341
      %v354 = vadd.f32 %v325, %v345
      %v355 = vadd.f32 %v326, %v349
      %v356 = vadd.f32 %v327, %v341
      %v357 = vadd.f32 %v328, %v345
      %v358 = vadd.f32 %v329, %v349
      %v359 = vadd.f32 %v330, %v341
      %v360 = vadd.f32 %v331, %v345
      %v361 = vadd.f32 %v332, %v349
      %v362 = vadd.f32 %v333, %v341
      %v363 = vadd.f32 %v334, %v345
      %v364 = vadd.f32 %v335, %v349
      %365 = vst [vmem:[#allocation8] sm:$0xff] %v353
      %366 = vst [vmem:[#allocation8 + $0x8] sm:$0xff] %v354
      %367 = vst [vmem:[#allocation8 + $0x10] sm:$0xff] %v355
      %368 = vst [vmem:[#allocation8 + $0x18] sm:$0xff] %v356
      %369 = vst [vmem:[#allocation8 + $0x20] sm:$0xff] %v357
      %370 = vst [vmem:[#allocation8 + $0x28] sm:$0xff] %v358
      %371 = vst [vmem:[#allocation8 + $0x30] sm:$0xff] %v359
      %372 = vst [vmem:[#allocation8 + $0x38] sm:$0xff] %v360
      %373 = vst [vmem:[#allocation8 + $0x40] sm:$0xff] %v361
      %374 = vst [vmem:[#allocation8 + $0x48] sm:$0xff] %v362
      %375 = vst [vmem:[#allocation8 + $0x50] sm:$0xff] %v363
      %376 = vst [vmem:[#allocation8 + $0x58] sm:$0xff] %v364
    $region29: #{tpu_custom_call.1} parent=1 // pred_fallthru
      _
    // Predicated region
    $region30: #{tpu_custom_call.1} parent=1 // pred_check
      _
    $region31: #{tpu_custom_call.1} parent=1 // pred_check_branch
      %378 = sbr.rel (0) target = $region33
    $region32: #{tpu_custom_call.1} parent=1 // pred_region
      %s380 = ssub.s32 1536, 1536
      %381 = vsyncadd [#allocation5], %s380
      %s382 = sshll.u32 [#allocation8], 4
      %s383 = int_to_ptr.vmem [resolvable:$true] %s382
      %388 = dma.vmem_to_hbm [thread:$0]  %s383, 1536, %s3, [#allocation5], 384, 384, 24
    $region33: #{tpu_custom_call.1} parent=1 // pred_fallthru
      _
    // Predicated region
    $region34: #{tpu_custom_call.1} parent=1 // pred_check
      _
    $region35: #{tpu_custom_call.1} parent=1 // pred_check_branch
      %390 = sbr.rel (0) target = $region37
    $region36: #{tpu_custom_call.1} parent=1 // pred_region
      %391 = dma.done [#allocation5], 1536
    $region37: #{tpu_custom_call.1} parent=1 // pred_fallthru
      _
    %392 = vsyncpa [#allocation4], 1
    %393 = vsyncpa [#allocation7], 1
    %394 = vsyncpa [#allocation5], 1

</llo_original>
